<compile_context>
chip_gen: v7x
topology: tpu7x:2x2x1
jax: 0.10.0
libtpu: 0.0.40
codegen_flags: <defaults>
</compile_context>

<pallas_src>
import functools

import jax
import jax.numpy as jnp
from jax import lax
from jax.experimental import pallas as pl
from jax.experimental.pallas import tpu as pltpu

EPS = 1e-12
OUT_LANES = 128   # lane-dense padded output width
TRUE_OUT = 2      # real output width of the final Linear(H, 2)


def _round_up(x, m):
    return ((x + m - 1) // m) * m


def _ncr_kernel(x_ref, w1_ref, b1_ref, gamma_ref, beta_ref, w2_ref, b2_ref, o_ref):
    # x_ref:     (tm, H)    matmul dtype (bf16 by default)
    # w1_ref:    (H, H)     matmul dtype
    # b1_ref:    (1, H)     f32
    # gamma_ref: (1, H)     f32
    # beta_ref:  (1, H)     f32
    # w2_ref:    (H, 128)   f32, zero-padded beyond column 1
    # b2_ref:    (1, 128)   f32, zero-padded
    # o_ref:     (tm, 128)
    # Linear(H, H) on the MXU with f32 accumulation, then bias + ReLU in f32.
    h = jnp.dot(x_ref[...], w1_ref[...], preferred_element_type=jnp.float32)
    h = jnp.maximum(h + b1_ref[...], 0.0)

    # BertLayerNorm (all statistics in f32).
    mu = jnp.mean(h, axis=-1, keepdims=True)
    centered = h - mu
    var = jnp.mean(centered * centered, axis=-1, keepdims=True)
    hn = centered * lax.rsqrt(var + EPS)
    hn = hn * gamma_ref[...] + beta_ref[...]

    # Dropout: identity (eval mode).

    # Final projection onto a lane-dense (128-wide, zero-padded) output slab.
    out = jnp.dot(hn, w2_ref[...], preferred_element_type=jnp.float32) + b2_ref[...]
    o_ref[...] = out.astype(o_ref.dtype)


@functools.partial(jax.jit, static_argnames=("tm", "matmul_dtype"))
def next_candidate_regression(x, w1, b1, gamma, beta, w2, b2, *,
                              tm=512, matmul_dtype=jnp.bfloat16):
    """x: (B, L, H) -> (B, L, 2)."""
    B, L, H = x.shape
    M = B * L
    out_dtype = x.dtype

    # Row-tile granularity: 16-row alignment for 16-bit operands (sublane packing),
    # 8 rows otherwise.  Clamp the tile so tiny inputs still use a single step.
    align = 16 if jnp.dtype(matmul_dtype).itemsize == 2 else 8
    tm_eff = max(align, min(_round_up(tm, align), _round_up(M, align)))
    m_pad = _round_up(M, tm_eff)

    x2d = x.reshape(M, H).astype(matmul_dtype)
    if m_pad != M:
        x2d = jnp.pad(x2d, ((0, m_pad - M), (0, 0)))

    w1_c = w1.astype(matmul_dtype)
    b1_2d = b1.reshape(1, H).astype(jnp.float32)
    gamma_2d = gamma.reshape(1, H).astype(jnp.float32)
    beta_2d = beta.reshape(1, H).astype(jnp.float32)

    # Lane-dense output: zero-pad the 2-wide projection to 128 columns.
    w2_p = jnp.zeros((H, OUT_LANES), jnp.float32).at[:, :TRUE_OUT].set(
        w2.astype(jnp.float32))
    b2_p = jnp.zeros((1, OUT_LANES), jnp.float32).at[:, :TRUE_OUT].set(
        b2.reshape(1, TRUE_OUT).astype(jnp.float32))

    grid = (m_pad // tm_eff,)

    # Conservative VMEM estimate: double-buffered blocks + f32 intermediates.
    mm_bytes = jnp.dtype(matmul_dtype).itemsize
    vmem_est = (2 * tm_eff * H * mm_bytes        # x tile (double-buffered)
                + 2 * H * H * mm_bytes           # w1
                + 3 * tm_eff * H * 4             # h / centered / hn
                + 2 * tm_eff * OUT_LANES * 4     # output tile (double-buffered)
                + 2 * H * OUT_LANES * 4          # padded w2
                + 8 * H * 4)                     # biases / gamma / beta
    compiler_kwargs = dict(dimension_semantics=("parallel",))
    if vmem_est > 16 * 1024 * 1024:              # above v5e's scoped default
        compiler_kwargs["vmem_limit_bytes"] = int(vmem_est + (16 << 20))

    cost = pl.CostEstimate(
        flops=2 * m_pad * H * H + 2 * m_pad * H * OUT_LANES,
        transcendentals=m_pad,                   # one rsqrt per row
        bytes_accessed=(m_pad * H * mm_bytes + H * H * mm_bytes
                        + m_pad * OUT_LANES * 4 + H * OUT_LANES * 4),
    )

    out2d = pl.pallas_call(
        _ncr_kernel,
        out_shape=jax.ShapeDtypeStruct((m_pad, OUT_LANES), out_dtype),
        grid_spec=pltpu.PrefetchScalarGridSpec(
            num_scalar_prefetch=0,
            grid=grid,
            in_specs=[
                pl.BlockSpec((tm_eff, H), lambda i: (i, 0)),        # x tile
                pl.BlockSpec((H, H), lambda i: (0, 0)),             # w1 (resident)
                pl.BlockSpec((1, H), lambda i: (0, 0)),             # b1
                pl.BlockSpec((1, H), lambda i: (0, 0)),             # gamma
                pl.BlockSpec((1, H), lambda i: (0, 0)),             # beta
                pl.BlockSpec((H, OUT_LANES), lambda i: (0, 0)),     # w2 (padded)
                pl.BlockSpec((1, OUT_LANES), lambda i: (0, 0)),     # b2 (padded)
            ],
            out_specs=pl.BlockSpec((tm_eff, OUT_LANES), lambda i: (i, 0)),
        ),
        compiler_params=pltpu.CompilerParams(**compiler_kwargs),
        cost_estimate=cost,
    )(x2d, w1_c, b1_2d, gamma_2d, beta_2d, w2_p, b2_p)

    return out2d[:M, :TRUE_OUT].reshape(B, L, TRUE_OUT)


def _reference(x, w1, b1, gamma, beta, w2, b2):
    h = jnp.maximum(x @ w1 + b1, 0.0)
    mu = jnp.mean(h, axis=-1, keepdims=True)
    var = jnp.mean((h - mu) ** 2, axis=-1, keepdims=True)
    hn = (h - mu) / jnp.sqrt(var + EPS)
    hn = hn * gamma + beta
    return hn @ w2 + b2


if __name__ == "__main__":
    key = jax.random.PRNGKey(0)
    B, L, H = 2, 8, 32  # batch, seq, hidden (small test shape; prod H >= 128 assumed)

    k_x, k_w1, k_b1, k_w2, k_b2 = jax.random.split(key, 5)

    x = jax.random.normal(k_x, (B, L, H), dtype=jnp.float32)

    # Deterministic parameter init (synthetic weights, not a checkpoint).
    w1 = jax.random.normal(k_w1, (H, H), dtype=jnp.float32) * 0.05
    b1 = jax.random.normal(k_b1, (H,), dtype=jnp.float32) * 0.02
    gamma = jnp.ones((H,), dtype=jnp.float32)
    beta = jnp.zeros((H,), dtype=jnp.float32)
    w2 = jax.random.normal(k_w2, (H, 2), dtype=jnp.float32) * 0.05
    b2 = jax.random.normal(k_b2, (2,), dtype=jnp.float32) * 0.02

    ref = _reference(x, w1, b1, gamma, beta, w2, b2)

    # Exact-math path (f32 matmul operands): tight tolerance check of kernel math.
    out_f32 = jax.block_until_ready(
        next_candidate_regression(x, w1, b1, gamma, beta, w2, b2,
                                  matmul_dtype=jnp.float32))
    assert out_f32.shape == (B, L, 2)
    assert jnp.allclose(out_f32, ref, atol=1e-4, rtol=1e-4), "f32 path mismatch"

    # Default fast path (bf16 matmul operands, f32 accumulation): looser tolerance.
    out_bf16 = jax.block_until_ready(
        next_candidate_regression(x, w1, b1, gamma, beta, w2, b2))
    assert out_bf16.shape == (B, L, 2)
    assert jnp.allclose(out_bf16, ref, atol=5e-2, rtol=5e-2), "bf16 path mismatch"

    print("KERNEL_OK")
</pallas_src>

<mosaic_0001>
module attributes {stable_mosaic.version = 11 : i64} {
  func.func @_ncr_kernel(%arg0: i32, %arg1: memref<16x32xf32, #tpu.memory_space<vmem>>, %arg2: memref<32x32xf32, #tpu.memory_space<vmem>>, %arg3: memref<1x32xf32, #tpu.memory_space<vmem>>, %arg4: memref<1x32xf32, #tpu.memory_space<vmem>>, %arg5: memref<1x32xf32, #tpu.memory_space<vmem>>, %arg6: memref<32x128xf32, #tpu.memory_space<vmem>>, %arg7: memref<1x128xf32, #tpu.memory_space<vmem>>, %arg8: memref<16x128xf32, #tpu.memory_space<vmem>>) attributes {dimension_semantics = [#tpu.dimension_semantics<parallel>], iteration_bounds = array<i64: 1>, scalar_prefetch = 0 : i64, scratch_operands = 0 : i64, tpu.core_type = #tpu.core_type<tc>, window_params = [{transform_indices = @transform_0, window_bounds = array<i64: 16, 32>}, {pipeline_mode = #tpu.pipeline_mode<synchronous>, transform_indices = @transform_1, window_bounds = array<i64: 32, 32>}, {pipeline_mode = #tpu.pipeline_mode<synchronous>, transform_indices = @transform_2, window_bounds = array<i64: 1, 32>}, {pipeline_mode = #tpu.pipeline_mode<synchronous>, transform_indices = @transform_3, window_bounds = array<i64: 1, 32>}, {pipeline_mode = #tpu.pipeline_mode<synchronous>, transform_indices = @transform_4, window_bounds = array<i64: 1, 32>}, {pipeline_mode = #tpu.pipeline_mode<synchronous>, transform_indices = @transform_5, window_bounds = array<i64: 32, 128>}, {pipeline_mode = #tpu.pipeline_mode<synchronous>, transform_indices = @transform_6, window_bounds = array<i64: 1, 128>}, {transform_indices = @transform_7, window_bounds = array<i64: 16, 128>}]} {
    %c0 = arith.constant 0 : index
    %c0_0 = arith.constant 0 : index
    %0 = vector.load %arg1[%c0, %c0_0] : memref<16x32xf32, #tpu.memory_space<vmem>>, vector<16x32xf32>
    %c0_1 = arith.constant 0 : index
    %c0_2 = arith.constant 0 : index
    %1 = vector.load %arg2[%c0_1, %c0_2] : memref<32x32xf32, #tpu.memory_space<vmem>>, vector<32x32xf32>
    %cst = arith.constant dense<0.000000e+00> : vector<16x32xf32>
    %2 = tpu.matmul %0, %1, %cst {dimension_numbers = #tpu.dot_dimension_numbers<[1], [0], [0], [1], [0, 0, 1, 1], [], []>} : vector<16x32xf32>, vector<32x32xf32>, vector<16x32xf32> -> vector<16x32xf32>
    %c0_3 = arith.constant 0 : index
    %c0_4 = arith.constant 0 : index
    %3 = vector.load %arg3[%c0_3, %c0_4] : memref<1x32xf32, #tpu.memory_space<vmem>>, vector<1x32xf32>
    %4 = vector.broadcast %3 : vector<1x32xf32> to vector<16x32xf32>
    %5 = arith.addf %2, %4 : vector<16x32xf32>
    %cst_5 = arith.constant 0.000000e+00 : f32
    %6 = vector.broadcast %cst_5 : f32 to vector<16x32xf32>
    %7 = arith.maximumf %5, %6 : vector<16x32xf32>
    %cst_6 = arith.constant dense<0.000000e+00> : vector<16xf32>
    %8 = vector.multi_reduction <add>, %7, %cst_6 [1] : vector<16x32xf32> to vector<16xf32>
    %9 = vector.shape_cast %8 : vector<16xf32> to vector<16x1xf32>
    %cst_7 = arith.constant 3.200000e+01 : f32
    %10 = vector.broadcast %cst_7 : f32 to vector<16x1xf32>
    %11 = arith.divf %9, %10 : vector<16x1xf32>
    %12 = vector.broadcast %11 : vector<16x1xf32> to vector<16x32xf32>
    %13 = arith.subf %7, %12 : vector<16x32xf32>
    %14 = arith.mulf %13, %13 : vector<16x32xf32>
    %cst_8 = arith.constant dense<0.000000e+00> : vector<16xf32>
    %15 = vector.multi_reduction <add>, %14, %cst_8 [1] : vector<16x32xf32> to vector<16xf32>
    %16 = vector.shape_cast %15 : vector<16xf32> to vector<16x1xf32>
    %cst_9 = arith.constant 3.200000e+01 : f32
    %17 = vector.broadcast %cst_9 : f32 to vector<16x1xf32>
    %18 = arith.divf %16, %17 : vector<16x1xf32>
    %cst_10 = arith.constant 9.99999996E-13 : f32
    %19 = vector.broadcast %cst_10 : f32 to vector<16x1xf32>
    %20 = arith.addf %18, %19 : vector<16x1xf32>
    %21 = math.rsqrt %20 : vector<16x1xf32>
    %22 = vector.broadcast %21 : vector<16x1xf32> to vector<16x32xf32>
    %23 = arith.mulf %13, %22 : vector<16x32xf32>
    %c0_11 = arith.constant 0 : index
    %c0_12 = arith.constant 0 : index
    %24 = vector.load %arg4[%c0_11, %c0_12] : memref<1x32xf32, #tpu.memory_space<vmem>>, vector<1x32xf32>
    %25 = vector.broadcast %24 : vector<1x32xf32> to vector<16x32xf32>
    %26 = arith.mulf %23, %25 : vector<16x32xf32>
    %c0_13 = arith.constant 0 : index
    %c0_14 = arith.constant 0 : index
    %27 = vector.load %arg5[%c0_13, %c0_14] : memref<1x32xf32, #tpu.memory_space<vmem>>, vector<1x32xf32>
    %28 = vector.broadcast %27 : vector<1x32xf32> to vector<16x32xf32>
    %29 = arith.addf %26, %28 : vector<16x32xf32>
    %c0_15 = arith.constant 0 : index
    %c0_16 = arith.constant 0 : index
    %30 = vector.load %arg6[%c0_15, %c0_16] : memref<32x128xf32, #tpu.memory_space<vmem>>, vector<32x128xf32>
    %cst_17 = arith.constant dense<0.000000e+00> : vector<16x128xf32>
    %31 = tpu.matmul %29, %30, %cst_17 {dimension_numbers = #tpu.dot_dimension_numbers<[1], [0], [0], [1], [0, 0, 1, 1], [], []>} : vector<16x32xf32>, vector<32x128xf32>, vector<16x128xf32> -> vector<16x128xf32>
    %c0_18 = arith.constant 0 : index
    %c0_19 = arith.constant 0 : index
    %32 = vector.load %arg7[%c0_18, %c0_19] : memref<1x128xf32, #tpu.memory_space<vmem>>, vector<1x128xf32>
    %33 = vector.broadcast %32 : vector<1x128xf32> to vector<16x128xf32>
    %34 = arith.addf %31, %33 : vector<16x128xf32>
    %c0_20 = arith.constant 0 : index
    %c0_21 = arith.constant 0 : index
    %35 = vector.load %arg8[%c0_20, %c0_21] : memref<16x128xf32, #tpu.memory_space<vmem>>, vector<16x128xf32>
    tpu.vector_store %arg8[%c0_20, %c0_21], %34 {strides = array<i32>} : memref<16x128xf32, #tpu.memory_space<vmem>>, vector<16x128xf32>,
    return
  }
  func.func @transform_0(%arg0: i32) -> (i32, i32) {
    %c0_i32 = arith.constant 0 : i32
    %c0_i32_0 = arith.constant 0 : i32
    return %arg0, %c0_i32 : i32, i32
  }
  func.func @transform_1(%arg0: i32) -> (i32, i32) {
    %c0_i32 = arith.constant 0 : i32
    %c0_i32_0 = arith.constant 0 : i32
    %c0_i32_1 = arith.constant 0 : i32
    return %c0_i32, %c0_i32_0 : i32, i32
  }
  func.func @transform_2(%arg0: i32) -> (i32, i32) {
    %c0_i32 = arith.constant 0 : i32
    %c0_i32_0 = arith.constant 0 : i32
    %c0_i32_1 = arith.constant 0 : i32
    return %c0_i32, %c0_i32_0 : i32, i32
  }
  func.func @transform_3(%arg0: i32) -> (i32, i32) {
    %c0_i32 = arith.constant 0 : i32
    %c0_i32_0 = arith.constant 0 : i32
    %c0_i32_1 = arith.constant 0 : i32
    return %c0_i32, %c0_i32_0 : i32, i32
  }
  func.func @transform_4(%arg0: i32) -> (i32, i32) {
    %c0_i32 = arith.constant 0 : i32
    %c0_i32_0 = arith.constant 0 : i32
    %c0_i32_1 = arith.constant 0 : i32
    return %c0_i32, %c0_i32_0 : i32, i32
  }
  func.func @transform_5(%arg0: i32) -> (i32, i32) {
    %c0_i32 = arith.constant 0 : i32
    %c0_i32_0 = arith.constant 0 : i32
    %c0_i32_1 = arith.constant 0 : i32
    return %c0_i32, %c0_i32_0 : i32, i32
  }
  func.func @transform_6(%arg0: i32) -> (i32, i32) {
    %c0_i32 = arith.constant 0 : i32
    %c0_i32_0 = arith.constant 0 : i32
    %c0_i32_1 = arith.constant 0 : i32
    return %c0_i32, %c0_i32_0 : i32, i32
  }
  func.func @transform_7(%arg0: i32) -> (i32, i32) {
    %c0_i32 = arith.constant 0 : i32
    %c0_i32_0 = arith.constant 0 : i32
    return %arg0, %c0_i32 : i32, i32
  }
}

</mosaic_0001>

<llo_original>
// kernel: next_candidate_regression.1
$region0: #{next_candidate_regression.1}
  #allocation0 [shape = 'u32[]', space=smem, size = 0x4, offset = 0x4, fixed_abs, tag = 'smem constant byte address 0x4 - core index']
  #allocation1 [shape = 'u32[144,128]{1,0:T(1,128)}', space=vmem, size = 0x12000, scoped, tag = 'internal scratch']
  %s0 = inlined_call_operand.vmem [shape: f32[16,32], index: 0, kind: input, shape index: {}]
  %s1 = inlined_call_operand.vmem [shape: f32[32,32], index: 1, kind: input, shape index: {}]
  %s2 = inlined_call_operand.vmem [shape: f32[1,32], index: 2, kind: input, shape index: {}]
  %s3 = inlined_call_operand.vmem [shape: f32[1,32], index: 3, kind: input, shape index: {}]
  %s4 = inlined_call_operand.vmem [shape: f32[1,32], index: 4, kind: input, shape index: {}]
  %s5 = inlined_call_operand.vmem [shape: f32[32,128], index: 5, kind: input, shape index: {}]
  %s6 = inlined_call_operand.vmem [shape: f32[1,128], index: 6, kind: input, shape index: {}]
  %s7 = inlined_call_operand.vmem [shape: f32[16,128], index: 7, kind: output, shape index: {}]
  %s8 = sld [smem:[#allocation0]]
  $region38: #{next_candidate_regression.1} parent=0
    _
  %s10 = ssub.s32 1, %s8
  %s11 = scalar_select 0, %s10, %s8
  // Predicated region
  $region2: #{next_candidate_regression.1} parent=0 // pred_check
    _
  $region3: #{next_candidate_regression.1} parent=0 // pred_check_branch
    %13 = sbr.rel (0) target = $region5
  $region4: #{next_candidate_regression.1} parent=0 // pred_region
    _
  $region5: #{next_candidate_regression.1} parent=0 // pred_fallthru
    _
  // Predicated region
  $region6: #{next_candidate_regression.1} parent=0 // pred_check
    _
  $region7: #{next_candidate_regression.1} parent=0 // pred_check_branch
    %15 = sbr.rel (0) target = $region9
  $region8: #{next_candidate_regression.1} parent=0 // pred_region
    _
  $region9: #{next_candidate_regression.1} parent=0 // pred_fallthru
    _
  // Predicated region
  $region10: #{next_candidate_regression.1} parent=0 // pred_check
    _
  $region11: #{next_candidate_regression.1} parent=0 // pred_check_branch
    %17 = sbr.rel (0) target = $region13
  $region12: #{next_candidate_regression.1} parent=0 // pred_region
    _
  $region13: #{next_candidate_regression.1} parent=0 // pred_fallthru
    _
  // Predicated region
  $region14: #{next_candidate_regression.1} parent=0 // pred_check
    _
  $region15: #{next_candidate_regression.1} parent=0 // pred_check_branch
    %19 = sbr.rel (0) target = $region17
  $region16: #{next_candidate_regression.1} parent=0 // pred_region
    _
  $region17: #{next_candidate_regression.1} parent=0 // pred_fallthru
    _
  // Predicated region
  $region18: #{next_candidate_regression.1} parent=0 // pred_check
    _
  $region19: #{next_candidate_regression.1} parent=0 // pred_check_branch
    %21 = sbr.rel (0) target = $region21
  $region20: #{next_candidate_regression.1} parent=0 // pred_region
    _
  $region21: #{next_candidate_regression.1} parent=0 // pred_fallthru
    _
  // Predicated region
  $region22: #{next_candidate_regression.1} parent=0 // pred_check
    _
  $region23: #{next_candidate_regression.1} parent=0 // pred_check_branch
    %23 = sbr.rel (0) target = $region25
  $region24: #{next_candidate_regression.1} parent=0 // pred_region
    _
  $region25: #{next_candidate_regression.1} parent=0 // pred_fallthru
    _
  // Predicated region
  $region26: #{next_candidate_regression.1} parent=0 // pred_check
    _
  $region27: #{next_candidate_regression.1} parent=0 // pred_check_branch
    %25 = sbr.rel (0) target = $region29
  $region28: #{next_candidate_regression.1} parent=0 // pred_region
    _
  $region29: #{next_candidate_regression.1} parent=0 // pred_fallthru
    _
  %v26 = vld [vmem:[%s0] sm:$0xff]
  %v27 = vld [vmem:[%s0 + $0x8] sm:$0xff]
  %v28 = vld [vmem:[%s1] sm:$0xff]
  %v29 = vld [vmem:[%s1 + $0x8] sm:$0xff]
  %v30 = vld [vmem:[%s1 + $0x10] sm:$0xff]
  %v31 = vld [vmem:[%s1 + $0x18] sm:$0xff]
  %v32 = vld [vmem:[%s2] sm:$0x1]
  %v34 = vlaneseq
  %v35 = vshrl.u32 %v34, 7
  %v36 = vsub.s32 0, %v35
  %v37 = vrot.slane %v32, %v36
  %vm39 = vcmask 261120
  %v41 = vsel %vm39, %v26, 0
  %v44 = vsel %vm39, %v27, 0
  %46 = vmatprep.subr.mxu0 0.0
  %47 = vmatpush1.msra.mxu0 %v28
  %48 = vmatprep.subr.mxu0 0.0
  %49 = vmatpush1.msra.mxu0 %v29
  %50 = vmatprep.subr.mxu0 0.0
  %51 = vmatpush1.msra.mxu0 %v30
  %52 = vmatprep.subr.mxu0 0.0
  %53 = vmatpush1.msra.mxu0 %v31
  %54 = vmatprep.subr.mxu0 0.0
  %55 = vmatpush1.msra.mxu0 0.0
  %56 = vmatprep.subr.mxu0 0.0
  %57 = vmatpush1.msra.mxu0 0.0
  %58 = vmatprep.subr.mxu0 0.0
  %59 = vmatpush1.msra.mxu0 0.0
  %60 = vmatprep.subr.mxu0 0.0
  %61 = vmatpush1.msra.mxu0 0.0
  %62 = vmatprep.subr.mxu0 0.0
  %63 = vmatpush1.msra.mxu0 0.0
  %64 = vmatprep.subr.mxu0 0.0
  %65 = vmatpush1.msra.mxu0 0.0
  %66 = vmatprep.subr.mxu0 0.0
  %67 = vmatpush1.msra.mxu0 0.0
  %68 = vmatprep.subr.mxu0 0.0
  %69 = vmatpush1.msra.mxu0 0.0
  %70 = vmatprep.subr.mxu0 0.0
  %71 = vmatpush1.msra.mxu0 0.0
  %72 = vmatprep.subr.mxu0 0.0
  %73 = vmatpush1.msra.mxu0 0.0
  %74 = vmatprep.subr.mxu0 0.0
  %75 = vmatpush1.msra.mxu0 0.0
  %76 = vmatprep.subr.mxu0 0.0
  %77 = vmatpush1.msra.mxu0 0.0
  %78 = vmatprep.subr.mxu0 0.0
  %79 = vmatpush1.msra.mxu0 0.0
  %80 = vmatprep.subr.mxu0 0.0
  %81 = vmatpush1.msra.mxu0 0.0
  %82 = vmatprep.subr.mxu0 0.0
  %83 = vmatpush1.msra.mxu0 0.0
  %84 = vmatprep.subr.mxu0 0.0
  %85 = vmatpush1.msra.mxu0 0.0
  %86 = vmatprep.subr.mxu0 0.0
  %87 = vmatpush1.msra.mxu0 0.0
  %88 = vmatprep.subr.mxu0 0.0
  %89 = vmatpush1.msra.mxu0 0.0
  %90 = vmatprep.subr.mxu0 0.0
  %91 = vmatpush1.msra.mxu0 0.0
  %92 = vmatprep.subr.mxu0 0.0
  %93 = vmatpush1.msra.mxu0 0.0
  %94 = vmatprep.subr.mxu0 0.0
  %95 = vmatpush1.msra.mxu0 0.0
  %96 = vmatprep.subr.mxu0 0.0
  %97 = vmatpush1.msra.mxu0 0.0
  %98 = vmatprep.subr.mxu0 0.0
  %99 = vmatpush1.msra.mxu0 0.0
  %100 = vmatprep.subr.mxu0 0.0
  %101 = vmatpush1.msra.mxu0 0.0
  %102 = vmatprep.subr.mxu0 0.0
  %103 = vmatpush1.msra.mxu0 0.0
  %104 = vmatprep.subr.mxu0 0.0
  %105 = vmatpush1.msra.mxu0 0.0
  %106 = vmatprep.subr.mxu0 0.0
  %107 = vmatpush1.msra.mxu0 0.0
  %108 = vmatprep.subr.mxu0 0.0
  %109 = vmatpush1.msra.mxu0 0.0
  %110 = vmatprep.mubr.f32.mxu0 0.0
  %111 = vmatmul.mubr.f32.gmra.mrb[0].mxu0 %v41
  %v112 = vpop.f32.mrb[0].mxu0
  %v113 = vadd.f32 %v37, %v112
  %v114 = vpop.f32.mrb[0].mxu0
  %115 = vmatprep.mubr.f32.mxu0 0.0
  %116 = vmatmul.mubr.f32.gmra.mrb[0].mxu0 %v44
  %v117 = vpop.f32.mrb[0].mxu0
  %v118 = vadd.f32 %v37, %v117
  %v119 = vpop.f32.mrb[0].mxu0
  %120 = vdwg.mxu0
  %v121 = vmax.f32 %v113, 0.0
  %v122 = vmax.f32 %v118, 0.0
  %v123 = vsel %vm39, %v121, 0.0
  %124 = vadd.xlane.f32.xlu0 %v123
  %v125 = vpop.xlane.xlu0 %124
  %v126 = vsel %vm39, %v122, 0.0
  %127 = vadd.xlane.f32.xlu0 %v126
  %v128 = vpop.xlane.xlu0 %127
  %v129 = vrcp.pop 32.0
  %v130 = vmul.f32 %v125, %v129
  %v131 = vmul.f32 %v128, %v129
  %v132 = vsub.f32 %v121, %v130
  %v133 = vsub.f32 %v122, %v131
  %v134 = vmul.f32 %v132, %v132
  %v135 = vmul.f32 %v133, %v133
  %v136 = vsel %vm39, %v134, 0.0
  %137 = vadd.xlane.f32.xlu0 %v136
  %v138 = vpop.xlane.xlu0 %137
  %v139 = vsel %vm39, %v135, 0.0
  %140 = vadd.xlane.f32.xlu0 %v139
  %v141 = vpop.xlane.xlu0 %140
  %v142 = vmul.f32 %v138, %v129
  %v143 = vmul.f32 %v141, %v129
  %v144 = vadd.f32 %v142, 1e-12
  %v145 = vadd.f32 %v143, 1e-12
  %v146 = vrsqrt.pop %v144
  %v147 = vrsqrt.pop %v145
  %v148 = vmul.f32 %v132, %v146
  %v149 = vmul.f32 %v133, %v147
  %v150 = vld [vmem:[%s3] sm:$0x1]
  %v152 = vlaneseq
  %v153 = vshrl.u32 %v152, 7
  %v154 = vsub.s32 0, %v153
  %v155 = vrot.slane %v150, %v154
  %v157 = vmul.f32 %v148, %v155
  %v158 = vmul.f32 %v149, %v155
  %v159 = vld [vmem:[%s4] sm:$0x1]
  %v161 = vlaneseq
  %v162 = vshrl.u32 %v161, 7
  %v163 = vsub.s32 0, %v162
  %v164 = vrot.slane %v159, %v163
  %v166 = vadd.f32 %v157, %v164
  %v167 = vadd.f32 %v158, %v164
  %v168 = vld [vmem:[%s5] sm:$0xff]
  %v169 = vld [vmem:[%s5 + $0x8] sm:$0xff]
  %v170 = vld [vmem:[%s5 + $0x10] sm:$0xff]
  %v171 = vld [vmem:[%s5 + $0x18] sm:$0xff]
  %v172 = vld [vmem:[%s6] sm:$0x1]
  %v174 = vlaneseq
  %v175 = vshrl.u32 %v174, 7
  %v176 = vsub.s32 0, %v175
  %v177 = vrot.slane %v172, %v176
  %v180 = vsel %vm39, %v166, 0
  %v183 = vsel %vm39, %v167, 0
  %185 = vmatprep.subr.mxu0 0.0
  %186 = vmatpush1.msra.mxu0 %v168
  %187 = vmatprep.subr.mxu0 0.0
  %188 = vmatpush1.msra.mxu0 %v169
  %189 = vmatprep.subr.mxu0 0.0
  %190 = vmatpush1.msra.mxu0 %v170
  %191 = vmatprep.subr.mxu0 0.0
  %192 = vmatpush1.msra.mxu0 %v171
  %193 = vmatprep.subr.mxu0 0.0
  %194 = vmatpush1.msra.mxu0 0.0
  %195 = vmatprep.subr.mxu0 0.0
  %196 = vmatpush1.msra.mxu0 0.0
  %197 = vmatprep.subr.mxu0 0.0
  %198 = vmatpush1.msra.mxu0 0.0
  %199 = vmatprep.subr.mxu0 0.0
  %200 = vmatpush1.msra.mxu0 0.0
  %201 = vmatprep.subr.mxu0 0.0
  %202 = vmatpush1.msra.mxu0 0.0
  %203 = vmatprep.subr.mxu0 0.0
  %204 = vmatpush1.msra.mxu0 0.0
  %205 = vmatprep.subr.mxu0 0.0
  %206 = vmatpush1.msra.mxu0 0.0
  %207 = vmatprep.subr.mxu0 0.0
  %208 = vmatpush1.msra.mxu0 0.0
  %209 = vmatprep.subr.mxu0 0.0
  %210 = vmatpush1.msra.mxu0 0.0
  %211 = vmatprep.subr.mxu0 0.0
  %212 = vmatpush1.msra.mxu0 0.0
  %213 = vmatprep.subr.mxu0 0.0
  %214 = vmatpush1.msra.mxu0 0.0
  %215 = vmatprep.subr.mxu0 0.0
  %216 = vmatpush1.msra.mxu0 0.0
  %217 = vmatprep.subr.mxu0 0.0
  %218 = vmatpush1.msra.mxu0 0.0
  %219 = vmatprep.subr.mxu0 0.0
  %220 = vmatpush1.msra.mxu0 0.0
  %221 = vmatprep.subr.mxu0 0.0
  %222 = vmatpush1.msra.mxu0 0.0
  %223 = vmatprep.subr.mxu0 0.0
  %224 = vmatpush1.msra.mxu0 0.0
  %225 = vmatprep.subr.mxu0 0.0
  %226 = vmatpush1.msra.mxu0 0.0
  %227 = vmatprep.subr.mxu0 0.0
  %228 = vmatpush1.msra.mxu0 0.0
  %229 = vmatprep.subr.mxu0 0.0
  %230 = vmatpush1.msra.mxu0 0.0
  %231 = vmatprep.subr.mxu0 0.0
  %232 = vmatpush1.msra.mxu0 0.0
  %233 = vmatprep.subr.mxu0 0.0
  %234 = vmatpush1.msra.mxu0 0.0
  %235 = vmatprep.subr.mxu0 0.0
  %236 = vmatpush1.msra.mxu0 0.0
  %237 = vmatprep.subr.mxu0 0.0
  %238 = vmatpush1.msra.mxu0 0.0
  %239 = vmatprep.subr.mxu0 0.0
  %240 = vmatpush1.msra.mxu0 0.0
  %241 = vmatprep.subr.mxu0 0.0
  %242 = vmatpush1.msra.mxu0 0.0
  %243 = vmatprep.subr.mxu0 0.0
  %244 = vmatpush1.msra.mxu0 0.0
  %245 = vmatprep.subr.mxu0 0.0
  %246 = vmatpush1.msra.mxu0 0.0
  %247 = vmatprep.subr.mxu0 0.0
  %248 = vmatpush1.msra.mxu0 0.0
  %249 = vmatprep.mubr.f32.mxu0 0.0
  %250 = vmatmul.mubr.f32.gmra.mrb[0].mxu0 %v180
  %v251 = vpop.f32.mrb[0].mxu0
  %v252 = vadd.f32 %v177, %v251
  %v253 = vpop.f32.mrb[0].mxu0
  %254 = vmatprep.mubr.f32.mxu0 0.0
  %255 = vmatmul.mubr.f32.gmra.mrb[0].mxu0 %v183
  %v256 = vpop.f32.mrb[0].mxu0
  %v257 = vadd.f32 %v177, %v256
  %v258 = vpop.f32.mrb[0].mxu0
  %259 = vdwg.mxu0
  %260 = vst [vmem:[%s7] sm:$0xff] %v252
  %261 = vst [vmem:[%s7 + $0x8] sm:$0xff] %v257
  // Predicated region
  $region30: #{next_candidate_regression.1} parent=0 // pred_check
    _
  $region31: #{next_candidate_regression.1} parent=0 // pred_check_branch
    %263 = sbr.rel (0) target = $region33
  $region32: #{next_candidate_regression.1} parent=0 // pred_region
    _
  $region33: #{next_candidate_regression.1} parent=0 // pred_fallthru
    _
  // Predicated region
  $region34: #{next_candidate_regression.1} parent=0 // pred_check
    _
  $region35: #{next_candidate_regression.1} parent=0 // pred_check_branch
    %265 = sbr.rel (0) target = $region37
  $region36: #{next_candidate_regression.1} parent=0 // pred_region
    _
  $region37: #{next_candidate_regression.1} parent=0 // pred_fallthru
    _

</llo_original>
